<compile_context>
chip_gen: v7x
topology: tpu7x:2x2x1
jax: 0.10.0
libtpu: 0.0.40
codegen_flags: <defaults>
</compile_context>

<pallas_src>
import functools

import jax
import jax.numpy as jnp
from jax import lax
from jax.experimental import pallas as pl
from jax.experimental.pallas import tpu as pltpu


def _round_up(a, b):
    return (a + b - 1) // b * b


def _vmem_budget_bytes():
    """Generation-aware VMEM budget (well below physical to leave headroom)."""
    try:
        phys = int(pltpu.get_tpu_info().vmem_capacity_bytes)
    except Exception:
        phys = 64 * 2**20          # conservative: v7x physical VMEM per core
    return max(16 * 2**20, min(int(phys * 3 // 4), 112 * 2**20))


# ---------------------------------------------------------------------------
# Path A: fused single-pass kernel (per-image slab(s) fit in VMEM).
# ---------------------------------------------------------------------------
def _channel_gate_fused_kernel(x_ref, w1_ref, b1_ref, w2_ref, b2_ref, o_ref,
                               *, hw):
    # x_ref: (B, C, HW) in native dtype; weights/biases f32 (PyTorch layout).
    x = x_ref[...]                                                   # (B, C, HW)
    bsz = x.shape[0]

    # Global pooling over the spatial (lane) axis; sum accumulated in f32,
    # max in native dtype (cast of the tiny result is exact for max).
    sum_x = jnp.sum(x, axis=-1, keepdims=True, dtype=jnp.float32)    # (B, C, 1)
    max_x = jnp.max(x, axis=-1, keepdims=True).astype(jnp.float32)   # (B, C, 1)
    avg_x = sum_x * (1.0 / float(hw))

    # Bottleneck MLP on the stacked (avg | max) columns, batched over images.
    p = jnp.concatenate([avg_x, max_x], axis=-1)                     # (B, C, 2)
    w1b = jnp.broadcast_to(w1_ref[...], (bsz,) + tuple(w1_ref.shape))
    w2b = jnp.broadcast_to(w2_ref[...], (bsz,) + tuple(w2_ref.shape))
    hid = jnp.einsum('bhc,bcp->bhp', w1b, p,
                     preferred_element_type=jnp.float32) + b1_ref[...]
    hid = jnp.maximum(hid, 0.0)                                      # (B, Ch, 2)
    a = jnp.einsum('bch,bhp->bcp', w2b, hid,
                   preferred_element_type=jnp.float32) + b2_ref[...]
    att = a[..., 0:1] + a[..., 1:2]                                  # (B, C, 1)
    scale = jax.nn.sigmoid(att)                                      # f32

    # Gate apply in the native dtype; (B,C,1) broadcasts along lanes for free.
    o_ref[...] = x * scale.astype(x.dtype)


# ---------------------------------------------------------------------------
# Path B: two-phase reduce-then-apply (large images).
# ---------------------------------------------------------------------------
def _channel_gate_reduce_kernel(x_ref, w1_ref, b1_ref, w2_ref, b2_ref, s_ref,
                                sum_sc, max_sc, *, hw, tile):
    h = pl.program_id(1)
    nh = pl.num_programs(1)

    @pl.when(h == 0)
    def _init():
        sum_sc[...] = jnp.zeros_like(sum_sc)
        max_sc[...] = jnp.full_like(max_sc, -jnp.inf)

    x = x_ref[0]                                                     # (C, tile)
    tail = hw % tile

    def _accum(xv):
        sum_sc[...] += jnp.sum(xv, axis=-1, keepdims=True, dtype=jnp.float32)
        max_sc[...] = jnp.maximum(
            max_sc[...], jnp.max(xv, axis=-1, keepdims=True).astype(jnp.float32))

    if tail == 0:
        _accum(x)                       # full tiles: no masking pass at all
    else:
        @pl.when(h < nh - 1)
        def _full_tiles():
            _accum(x)

        @pl.when(h == nh - 1)           # mask only the single tail tile
        def _tail_tile():
            lane = lax.broadcasted_iota(jnp.int32, x.shape, 1)
            valid = lane < tail
            xs = jnp.where(valid, x, jnp.zeros((), dtype=x.dtype))
            xm = jnp.where(valid, x, jnp.asarray(-jnp.inf, dtype=x.dtype))
            sum_sc[...] += jnp.sum(xs, axis=-1, keepdims=True, dtype=jnp.float32)
            max_sc[...] = jnp.maximum(
                max_sc[...],
                jnp.max(xm, axis=-1, keepdims=True).astype(jnp.float32))

    @pl.when(h == nh - 1)
    def _finalize():
        avg_x = sum_sc[...] * (1.0 / float(hw))
        p = jnp.concatenate([avg_x, max_sc[...]], axis=-1)           # (C, 2)
        hid = jnp.dot(w1_ref[...], p,
                      preferred_element_type=jnp.float32) + b1_ref[...]
        hid = jnp.maximum(hid, 0.0)                                  # (Ch, 2)
        a = jnp.dot(w2_ref[...], hid,
                    preferred_element_type=jnp.float32) + b2_ref[...]
        att = a[:, 0:1] + a[:, 1:2]                                  # (C, 1)
        s_ref[0] = jax.nn.sigmoid(att)


def _channel_gate_apply_kernel(x_ref, s_ref, o_ref):
    # x: (1, C, T) native dtype, s: (1, C, 1) f32. Lane broadcast is free.
    o_ref[...] = x_ref[...] * s_ref[...].astype(o_ref.dtype)


# ---------------------------------------------------------------------------
# Wrapper
# ---------------------------------------------------------------------------
def channel_gate(x_nchw, w1, b1, w2, b2, *, force_two_phase=False, hw_tile=None):
    """CBAM ChannelGate forward (pool_types=['avg', 'max']).

    x_nchw: (N, C, H, W), any float dtype (kept end-to-end on the stream path).
    w1: (C//r, C), b1: (C//r,), w2: (C, C//r), b2: (C,)  -- nn.Linear layout.
    """
    N, C, H, W = x_nchw.shape
    HW = H * W
    Ch = w1.shape[0]
    dt = x_nchw.dtype
    itemsize = jnp.dtype(dt).itemsize

    x = x_nchw.reshape(N, C, HW)                      # free (contiguous) reshape
    w1f = w1.astype(jnp.float32)
    w2f = w2.astype(jnp.float32)
    b1c = b1.reshape(Ch, 1).astype(jnp.float32)
    b2c = b2.reshape(C, 1).astype(jnp.float32)

    budget = _vmem_budget_bytes()
    params_bytes = 4 * (Ch * C + Ch + C * Ch + C)
    headroom = 2 << 20
    sub_c = _round_up(C, 8)
    lane_hw = _round_up(HW, 128)
    slab = sub_c * lane_hw * itemsize                 # padded VMEM bytes / image

    fit_single = 4 * slab + 2 * params_bytes + headroom <= budget
    use_two_phase = force_two_phase or not fit_single

    if not use_two_phase:
        # ---- Path A: fused single pass, B images per grid step. ----
        b_fit = max(1, (budget - 2 * params_bytes - headroom) // (4 * slab))
        b_target = max(1, (2 << 20) // slab)          # ~2 MiB blocks
        b_cap = int(min(N, b_fit, b_target, 256))
        B = max(d for d in range(1, b_cap + 1) if N % d == 0)
        vmem_limit = int(min(budget,
                             max(32 << 20,
                                 4 * B * slab + 2 * params_bytes + (4 << 20))))

        kernel = functools.partial(_channel_gate_fused_kernel, hw=HW)
        out = pl.pallas_call(
            kernel,
            out_shape=jax.ShapeDtypeStruct((N, C, HW), dt),
            grid=(N // B,),
            in_specs=[
                pl.BlockSpec((B, C, HW), lambda i: (i, 0, 0)),   # image slab(s)
                pl.BlockSpec((Ch, C), lambda i: (0, 0)),         # VMEM-resident
                pl.BlockSpec((Ch, 1), lambda i: (0, 0)),
                pl.BlockSpec((C, Ch), lambda i: (0, 0)),
                pl.BlockSpec((C, 1), lambda i: (0, 0)),
            ],
            out_specs=pl.BlockSpec((B, C, HW), lambda i: (i, 0, 0)),
            compiler_params=pltpu.CompilerParams(
                dimension_semantics=("parallel",),
                vmem_limit_bytes=vmem_limit,
            ),
        )(x, w1f, b1c, w2f, b2c)
        return out.reshape(N, C, H, W)

    # ---- Path B: two-phase reduce-then-apply with HW tiles. ----
    if hw_tile is None:
        T = max(128, ((2 << 20) // (sub_c * itemsize)) // 128 * 128)
    else:
        T = int(hw_tile)
    T = int(min(T, lane_hw))
    T = max(128, (T // 128) * 128)
    nh = int(pl.cdiv(HW, T))
    block_bytes = sub_c * T * itemsize
    vmem_limit = int(min(budget,
                         max(32 << 20,
                             4 * block_bytes + 2 * params_bytes + (4 << 20))))

    reduce_kernel = functools.partial(_channel_gate_reduce_kernel, hw=HW, tile=T)
    scale = pl.pallas_call(
        reduce_kernel,
        out_shape=jax.ShapeDtypeStruct((N, C, 1), jnp.float32),
        grid=(N, nh),
        in_specs=[
            pl.BlockSpec((1, C, T), lambda n, h: (n, 0, h)),
            pl.BlockSpec((Ch, C), lambda n, h: (0, 0)),
            pl.BlockSpec((Ch, 1), lambda n, h: (0, 0)),
            pl.BlockSpec((C, Ch), lambda n, h: (0, 0)),
            pl.BlockSpec((C, 1), lambda n, h: (0, 0)),
        ],
        out_specs=pl.BlockSpec((1, C, 1), lambda n, h: (n, 0, 0)),
        scratch_shapes=[pltpu.VMEM((C, 1), jnp.float32),
                        pltpu.VMEM((C, 1), jnp.float32)],
        compiler_params=pltpu.CompilerParams(
            dimension_semantics=("parallel", "arbitrary"),
            vmem_limit_bytes=vmem_limit,
        ),
    )(x, w1f, b1c, w2f, b2c)

    out = pl.pallas_call(
        _channel_gate_apply_kernel,
        out_shape=jax.ShapeDtypeStruct((N, C, HW), dt),
        grid=(N, nh),
        in_specs=[
            pl.BlockSpec((1, C, T), lambda n, h: (n, 0, h)),
            pl.BlockSpec((1, C, 1), lambda n, h: (n, 0, 0)),
        ],
        out_specs=pl.BlockSpec((1, C, T), lambda n, h: (n, 0, h)),
        compiler_params=pltpu.CompilerParams(
            dimension_semantics=("parallel", "parallel"),
            vmem_limit_bytes=vmem_limit,
        ),
    )(x, scale)
    return out.reshape(N, C, H, W)


def reference_channel_gate(x_nchw, w1, b1, w2, b2):
    """Pure-JAX reference matching the PyTorch forward (pool_types=['avg','max'])."""
    N, C, H, W = x_nchw.shape
    xf = x_nchw.astype(jnp.float32).reshape(N, C, H * W)
    avg_pool = jnp.mean(xf, axis=-1)
    max_pool = jnp.max(xf, axis=-1)

    def mlp(p):
        h = jnp.maximum(p @ w1.T + b1, 0.0)
        return h @ w2.T + b2

    att = mlp(avg_pool) + mlp(max_pool)
    scale = jax.nn.sigmoid(att)[:, :, None, None]
    return x_nchw.astype(jnp.float32) * scale


if __name__ == "__main__":
    key = jax.random.PRNGKey(0)
    k_x, k_w1, k_b1, k_w2, k_b2, k_x2 = jax.random.split(key, 6)

    # Shapes consistent with the module (gate_channels divisible by r=16).
    N, C, H, W = 2, 32, 16, 16
    reduction_ratio = 16
    Ch = C // reduction_ratio

    x = jax.random.normal(k_x, (N, C, H, W), dtype=jnp.float32)
    # nn.Linear layout: W1 (Ch, C), b1 (Ch,), W2 (C, Ch), b2 (C,).
    w1 = 0.1 * jax.random.normal(k_w1, (Ch, C), dtype=jnp.float32)
    b1 = 0.1 * jax.random.normal(k_b1, (Ch,), dtype=jnp.float32)
    w2 = 0.1 * jax.random.normal(k_w2, (C, Ch), dtype=jnp.float32)
    b2 = 0.1 * jax.random.normal(k_b2, (C,), dtype=jnp.float32)

    ref = reference_channel_gate(x, w1, b1, w2, b2)

    # Test 1: fused path, 128-multiple spatial extent, f32.
    out = jax.block_until_ready(channel_gate(x, w1, b1, w2, b2))
    assert out.shape == (N, C, H, W)
    assert jnp.allclose(out, ref, atol=1e-5, rtol=1e-5), "f32 mismatch"

    # Test 2: non-128-multiple spatial extent (masked tail stores, no pad copy).
    H2, W2 = 7, 9  # HW = 63
    x2 = jax.random.normal(k_x2, (N, C, H2, W2), dtype=jnp.float32)
    out2 = jax.block_until_ready(channel_gate(x2, w1, b1, w2, b2))
    ref2 = reference_channel_gate(x2, w1, b1, w2, b2)
    assert jnp.allclose(out2, ref2, atol=1e-5, rtol=1e-5), "unaligned-HW mismatch"

    # Test 3: native bf16 streaming (gate apply in bf16), looser tolerance.
    xb = x.astype(jnp.bfloat16)
    outb = jax.block_until_ready(channel_gate(xb, w1, b1, w2, b2))
    assert outb.dtype == jnp.bfloat16
    refb = reference_channel_gate(xb.astype(jnp.float32), w1, b1, w2, b2)
    assert jnp.allclose(outb.astype(jnp.float32), refb, atol=5e-2, rtol=5e-2), \
        "bf16 mismatch"

    # Test 4: two-phase reduce-then-apply path (forced with small tiles; this is
    # the path taken automatically when the per-image slab exceeds the VMEM
    # budget). Covers both aligned and masked-tail spatial tiles.
    out4 = jax.block_until_ready(
        channel_gate(x, w1, b1, w2, b2, force_two_phase=True, hw_tile=128))
    assert jnp.allclose(out4, ref, atol=1e-5, rtol=1e-5), "two-phase mismatch"
    out5 = jax.block_until_ready(
        channel_gate(x2, w1, b1, w2, b2, force_two_phase=True, hw_tile=128))
    assert jnp.allclose(out5, ref2, atol=1e-5, rtol=1e-5), "two-phase tail mismatch"

    print("KERNEL_OK")
</pallas_src>

<mosaic_0001>
module attributes {stable_mosaic.version = 11 : i64} {
  func.func @_channel_gate_fused_kernel(%arg0: i32, %arg1: memref<2x32x256xf32, #tpu.memory_space<vmem>>, %arg2: memref<2x32xf32, #tpu.memory_space<vmem>>, %arg3: memref<2x1xf32, #tpu.memory_space<vmem>>, %arg4: memref<32x2xf32, #tpu.memory_space<vmem>>, %arg5: memref<32x1xf32, #tpu.memory_space<vmem>>, %arg6: memref<2x32x256xf32, #tpu.memory_space<vmem>>) attributes {dimension_semantics = [#tpu.dimension_semantics<parallel>], iteration_bounds = array<i64: 1>, scalar_prefetch = 0 : i64, scratch_operands = 0 : i64, tpu.core_type = #tpu.core_type<tc>, window_params = [{transform_indices = @transform_0, window_bounds = array<i64: 2, 32, 256>}, {pipeline_mode = #tpu.pipeline_mode<synchronous>, transform_indices = @transform_1, window_bounds = array<i64: 2, 32>}, {pipeline_mode = #tpu.pipeline_mode<synchronous>, transform_indices = @transform_2, window_bounds = array<i64: 2, 1>}, {pipeline_mode = #tpu.pipeline_mode<synchronous>, transform_indices = @transform_3, window_bounds = array<i64: 32, 2>}, {pipeline_mode = #tpu.pipeline_mode<synchronous>, transform_indices = @transform_4, window_bounds = array<i64: 32, 1>}, {transform_indices = @transform_5, window_bounds = array<i64: 2, 32, 256>}]} {
    %c0 = arith.constant 0 : index
    %c0_0 = arith.constant 0 : index
    %c0_1 = arith.constant 0 : index
    %0 = vector.load %arg1[%c0, %c0_0, %c0_1] : memref<2x32x256xf32, #tpu.memory_space<vmem>>, vector<2x32x256xf32>
    %cst = arith.constant dense<0.000000e+00> : vector<2x32xf32>
    %1 = vector.multi_reduction <add>, %0, %cst [2] : vector<2x32x256xf32> to vector<2x32xf32>
    %2 = vector.shape_cast %1 : vector<2x32xf32> to vector<2x32x1xf32>
    %cst_2 = arith.constant dense<0xFF800000> : vector<2x32xf32>
    %3 = vector.multi_reduction <maximumf>, %0, %cst_2 [2] : vector<2x32x256xf32> to vector<2x32xf32>
    %4 = vector.shape_cast %3 : vector<2x32xf32> to vector<2x32x1xf32>
    %cst_3 = arith.constant 3.906250e-03 : f32
    %5 = vector.broadcast %cst_3 : f32 to vector<2x32x1xf32>
    %6 = arith.mulf %2, %5 : vector<2x32x1xf32>
    %7 = tpu.concatenate %6, %4 in 2 : vector<2x32x1xf32>, vector<2x32x1xf32> -> vector<2x32x2xf32>
    %c0_4 = arith.constant 0 : index
    %c0_5 = arith.constant 0 : index
    %8 = vector.load %arg2[%c0_4, %c0_5] : memref<2x32xf32, #tpu.memory_space<vmem>>, vector<2x32xf32>
    %9 = vector.shape_cast %8 : vector<2x32xf32> to vector<1x2x32xf32>
    %10 = vector.broadcast %9 : vector<1x2x32xf32> to vector<2x2x32xf32>
    %c0_6 = arith.constant 0 : index
    %c0_7 = arith.constant 0 : index
    %11 = vector.load %arg4[%c0_6, %c0_7] : memref<32x2xf32, #tpu.memory_space<vmem>>, vector<32x2xf32>
    %12 = vector.shape_cast %11 : vector<32x2xf32> to vector<1x32x2xf32>
    %13 = vector.broadcast %12 : vector<1x32x2xf32> to vector<2x32x2xf32>
    "tpu.trace_start"() <{level = 10 : i32, message = "bhc,bcp->bhp"}> : () -> ()
    %cst_8 = arith.constant dense<0.000000e+00> : vector<2x2x2xf32>
    %14 = tpu.matmul %10, %7, %cst_8 {dimension_numbers = #tpu.dot_dimension_numbers<[2], [1], [1], [2], [0, 0, 0, 1, 1, 2], [0], [0]>} : vector<2x2x32xf32>, vector<2x32x2xf32>, vector<2x2x2xf32> -> vector<2x2x2xf32>
    "tpu.trace_stop"() : () -> ()
    %c0_9 = arith.constant 0 : index
    %c0_10 = arith.constant 0 : index
    %15 = vector.load %arg3[%c0_9, %c0_10] : memref<2x1xf32, #tpu.memory_space<vmem>>, vector<2x1xf32>
    %16 = vector.shape_cast %15 : vector<2x1xf32> to vector<1x2x1xf32>
    %17 = vector.broadcast %16 : vector<1x2x1xf32> to vector<2x2x2xf32>
    %18 = arith.addf %14, %17 : vector<2x2x2xf32>
    %cst_11 = arith.constant 0.000000e+00 : f32
    %19 = vector.broadcast %cst_11 : f32 to vector<2x2x2xf32>
    %20 = arith.maximumf %18, %19 : vector<2x2x2xf32>
    "tpu.trace_start"() <{level = 10 : i32, message = "bch,bhp->bcp"}> : () -> ()
    %cst_12 = arith.constant dense<0.000000e+00> : vector<2x32x2xf32>
    %21 = tpu.matmul %13, %20, %cst_12 {dimension_numbers = #tpu.dot_dimension_numbers<[2], [1], [1], [2], [0, 0, 0, 1, 1, 2], [0], [0]>} : vector<2x32x2xf32>, vector<2x2x2xf32>, vector<2x32x2xf32> -> vector<2x32x2xf32>
    "tpu.trace_stop"() : () -> ()
    %c0_13 = arith.constant 0 : index
    %c0_14 = arith.constant 0 : index
    %22 = vector.load %arg5[%c0_13, %c0_14] : memref<32x1xf32, #tpu.memory_space<vmem>>, vector<32x1xf32>
    %23 = vector.shape_cast %22 : vector<32x1xf32> to vector<1x32x1xf32>
    %24 = vector.broadcast %23 : vector<1x32x1xf32> to vector<2x32x2xf32>
    %25 = arith.addf %21, %24 : vector<2x32x2xf32>
    %26 = vector.extract_strided_slice %25 {offsets = [0, 0, 0], sizes = [2, 32, 1], strides = [1, 1, 1]} : vector<2x32x2xf32> to vector<2x32x1xf32>
    %27 = vector.extract_strided_slice %25 {offsets = [0, 0, 1], sizes = [2, 32, 1], strides = [1, 1, 1]} : vector<2x32x2xf32> to vector<2x32x1xf32>
    %28 = arith.addf %26, %27 : vector<2x32x1xf32>
    %29 = arith.negf %28 : vector<2x32x1xf32>
    %30 = math.exp %29 : vector<2x32x1xf32>
    %cst_15 = arith.constant 1.000000e+00 : f32
    %31 = vector.broadcast %cst_15 : f32 to vector<2x32x1xf32>
    %32 = arith.addf %31, %30 : vector<2x32x1xf32>
    %33 = arith.divf %31, %32 : vector<2x32x1xf32>
    %34 = vector.broadcast %33 : vector<2x32x1xf32> to vector<2x32x256xf32>
    %35 = arith.mulf %0, %34 : vector<2x32x256xf32>
    %c0_16 = arith.constant 0 : index
    %c0_17 = arith.constant 0 : index
    %c0_18 = arith.constant 0 : index
    %36 = vector.load %arg6[%c0_16, %c0_17, %c0_18] : memref<2x32x256xf32, #tpu.memory_space<vmem>>, vector<2x32x256xf32>
    tpu.vector_store %arg6[%c0_16, %c0_17, %c0_18], %35 {strides = array<i32>} : memref<2x32x256xf32, #tpu.memory_space<vmem>>, vector<2x32x256xf32>,
    return
  }
  func.func @transform_0(%arg0: i32) -> (i32, i32, i32) {
    %c0_i32 = arith.constant 0 : i32
    %c0_i32_0 = arith.constant 0 : i32
    %c0_i32_1 = arith.constant 0 : i32
    return %arg0, %c0_i32, %c0_i32_0 : i32, i32, i32
  }
  func.func @transform_1(%arg0: i32) -> (i32, i32) {
    %c0_i32 = arith.constant 0 : i32
    %c0_i32_0 = arith.constant 0 : i32
    %c0_i32_1 = arith.constant 0 : i32
    return %c0_i32, %c0_i32_0 : i32, i32
  }
  func.func @transform_2(%arg0: i32) -> (i32, i32) {
    %c0_i32 = arith.constant 0 : i32
    %c0_i32_0 = arith.constant 0 : i32
    %c0_i32_1 = arith.constant 0 : i32
    return %c0_i32, %c0_i32_0 : i32, i32
  }
  func.func @transform_3(%arg0: i32) -> (i32, i32) {
    %c0_i32 = arith.constant 0 : i32
    %c0_i32_0 = arith.constant 0 : i32
    %c0_i32_1 = arith.constant 0 : i32
    return %c0_i32, %c0_i32_0 : i32, i32
  }
  func.func @transform_4(%arg0: i32) -> (i32, i32) {
    %c0_i32 = arith.constant 0 : i32
    %c0_i32_0 = arith.constant 0 : i32
    %c0_i32_1 = arith.constant 0 : i32
    return %c0_i32, %c0_i32_0 : i32, i32
  }
  func.func @transform_5(%arg0: i32) -> (i32, i32, i32) {
    %c0_i32 = arith.constant 0 : i32
    %c0_i32_0 = arith.constant 0 : i32
    %c0_i32_1 = arith.constant 0 : i32
    return %arg0, %c0_i32, %c0_i32_0 : i32, i32, i32
  }
}

</mosaic_0001>

<llo_original>
// kernel: tpu_custom_call.1
$region0: #{tpu_custom_call.1}
  #allocation0 [shape = 'u32[]', space=smem, size = 0x4, offset = 0x4, fixed_abs, tag = 'smem constant byte address 0x4 - core index']
  #allocation1 [shape = 'u32[144,128]{1,0:T(1,128)}', space=vmem, size = 0x12000, scoped, tag = 'internal scratch']
  %s0 = inlined_call_operand.hbm [shape: f32[2,32,256], index: 0, kind: input, shape index: {}]
  %s1 = inlined_call_operand.vmem [shape: f32[2,32], index: 1, kind: input, shape index: {}]
  %s2 = inlined_call_operand.vmem [shape: f32[2,1], index: 2, kind: input, shape index: {}]
  %s3 = inlined_call_operand.vmem [shape: f32[32,2], index: 3, kind: input, shape index: {}]
  %s4 = inlined_call_operand.vmem [shape: f32[32,1], index: 4, kind: input, shape index: {}]
  %s5 = inlined_call_operand.hbm [shape: f32[2,32,256], index: 5, kind: output, shape index: {}]
  %s6 = sld [smem:[#allocation0]]
  $region34: #{tpu_custom_call.1} parent=0
    _
  %s8 = ssub.s32 1, %s6
  %s9 = scalar_select 0, %s8, %s6
  $region1: #{tpu_custom_call.1} parent=0
    #allocation2 [shape = 'u8[65536]{0}', space=vmem, size = 0x10000, scoped, tag = 'input window, operand 0, single buffered']
    #allocation3 [shape = 's32[1]{0}', space=sflag, size = 0x4, scoped, tag = 'scoped memory for tpu_custom_call.1']
    #allocation4 [shape = 's32[1]{0}', space=sflag, size = 0x4, scoped, tag = 'scoped memory for tpu_custom_call.1']
    #allocation5 [shape = 'u8[65536]{0}', space=vmem, size = 0x10000, scoped, tag = 'output window, operand 0, single buffered']
    %10 = vsyncpa [#allocation3], 0
    %11 = vsyncpa [#allocation4], 0
    // Predicated region
    $region2: #{tpu_custom_call.1} parent=1 // pred_check
      _
    $region3: #{tpu_custom_call.1} parent=1 // pred_check_branch
      %13 = sbr.rel (0) target = $region5
    $region4: #{tpu_custom_call.1} parent=1 // pred_region
      %s15 = ssub.s32 2048, 2048
      %16 = vsyncadd [#allocation3], %s15
      %s17 = sshll.u32 [#allocation2], 4
      %s18 = int_to_ptr.vmem [resolvable:$true] %s17
      %23 = dma.hbm_to_vmem [thread:$0]  %s0, 2048, %s18, [#allocation3], 256, 256, 16
    $region5: #{tpu_custom_call.1} parent=1 // pred_fallthru
      _
    // Predicated region
    $region6: #{tpu_custom_call.1} parent=1 // pred_check
      _
    $region7: #{tpu_custom_call.1} parent=1 // pred_check_branch
      %25 = sbr.rel (0) target = $region9
    $region8: #{tpu_custom_call.1} parent=1 // pred_region
      _
    $region9: #{tpu_custom_call.1} parent=1 // pred_fallthru
      _
    // Predicated region
    $region10: #{tpu_custom_call.1} parent=1 // pred_check
      _
    $region11: #{tpu_custom_call.1} parent=1 // pred_check_branch
      %27 = sbr.rel (0) target = $region13
    $region12: #{tpu_custom_call.1} parent=1 // pred_region
      _
    $region13: #{tpu_custom_call.1} parent=1 // pred_fallthru
      _
    // Predicated region
    $region14: #{tpu_custom_call.1} parent=1 // pred_check
      _
    $region15: #{tpu_custom_call.1} parent=1 // pred_check_branch
      %29 = sbr.rel (0) target = $region17
    $region16: #{tpu_custom_call.1} parent=1 // pred_region
      _
    $region17: #{tpu_custom_call.1} parent=1 // pred_fallthru
      _
    // Predicated region
    $region18: #{tpu_custom_call.1} parent=1 // pred_check
      _
    $region19: #{tpu_custom_call.1} parent=1 // pred_check_branch
      %31 = sbr.rel (0) target = $region21
    $region20: #{tpu_custom_call.1} parent=1 // pred_region
      _
    $region21: #{tpu_custom_call.1} parent=1 // pred_fallthru
      _
    // Predicated region
    $region22: #{tpu_custom_call.1} parent=1 // pred_check
      _
    $region23: #{tpu_custom_call.1} parent=1 // pred_check_branch
      %33 = sbr.rel (0) target = $region25
    $region24: #{tpu_custom_call.1} parent=1 // pred_region
      %34 = dma.done [#allocation3], 2048
    $region25: #{tpu_custom_call.1} parent=1 // pred_fallthru
      _
    %v35 = vld [vmem:[#allocation2] sm:$0xff]
    %v36 = vld [vmem:[#allocation2 + $0x8] sm:$0xff]
    %v37 = vld [vmem:[#allocation2 + $0x10] sm:$0xff]
    %v38 = vld [vmem:[#allocation2 + $0x18] sm:$0xff]
    %v39 = vld [vmem:[#allocation2 + $0x20] sm:$0xff]
    %v40 = vld [vmem:[#allocation2 + $0x28] sm:$0xff]
    %v41 = vld [vmem:[#allocation2 + $0x30] sm:$0xff]
    %v42 = vld [vmem:[#allocation2 + $0x38] sm:$0xff]
    %v43 = vld [vmem:[#allocation2 + $0x40] sm:$0xff]
    %v44 = vld [vmem:[#allocation2 + $0x48] sm:$0xff]
    %v45 = vld [vmem:[#allocation2 + $0x50] sm:$0xff]
    %v46 = vld [vmem:[#allocation2 + $0x58] sm:$0xff]
    %v47 = vld [vmem:[#allocation2 + $0x60] sm:$0xff]
    %v48 = vld [vmem:[#allocation2 + $0x68] sm:$0xff]
    %v49 = vld [vmem:[#allocation2 + $0x70] sm:$0xff]
    %v50 = vld [vmem:[#allocation2 + $0x78] sm:$0xff]
    %v51 = vadd.f32 %v35, %v36
    %52 = vadd.xlane.f32.xlu0 %v51
    %v53 = vpop.xlane.xlu0 %52
    %v54 = vadd.f32 %v37, %v38
    %55 = vadd.xlane.f32.xlu0 %v54
    %v56 = vpop.xlane.xlu0 %55
    %v57 = vadd.f32 %v39, %v40
    %58 = vadd.xlane.f32.xlu0 %v57
    %v59 = vpop.xlane.xlu0 %58
    %v60 = vadd.f32 %v41, %v42
    %61 = vadd.xlane.f32.xlu0 %v60
    %v62 = vpop.xlane.xlu0 %61
    %v63 = vadd.f32 %v43, %v44
    %64 = vadd.xlane.f32.xlu0 %v63
    %v65 = vpop.xlane.xlu0 %64
    %v66 = vadd.f32 %v45, %v46
    %67 = vadd.xlane.f32.xlu0 %v66
    %v68 = vpop.xlane.xlu0 %67
    %v69 = vadd.f32 %v47, %v48
    %70 = vadd.xlane.f32.xlu0 %v69
    %v71 = vpop.xlane.xlu0 %70
    %v72 = vadd.f32 %v49, %v50
    %73 = vadd.xlane.f32.xlu0 %v72
    %v74 = vpop.xlane.xlu0 %73
    %v75 = vmax.f32 %v35, %v36
    %76 = vmax.xlane.f32.xlu0 %v75
    %v77 = vpop.xlane.xlu0 %76
    %v78 = vmax.f32 %v37, %v38
    %79 = vmax.xlane.f32.xlu0 %v78
    %v80 = vpop.xlane.xlu0 %79
    %v81 = vmax.f32 %v39, %v40
    %82 = vmax.xlane.f32.xlu0 %v81
    %v83 = vpop.xlane.xlu0 %82
    %v84 = vmax.f32 %v41, %v42
    %85 = vmax.xlane.f32.xlu0 %v84
    %v86 = vpop.xlane.xlu0 %85
    %v87 = vmax.f32 %v43, %v44
    %88 = vmax.xlane.f32.xlu0 %v87
    %v89 = vpop.xlane.xlu0 %88
    %v90 = vmax.f32 %v45, %v46
    %91 = vmax.xlane.f32.xlu0 %v90
    %v92 = vpop.xlane.xlu0 %91
    %v93 = vmax.f32 %v47, %v48
    %94 = vmax.xlane.f32.xlu0 %v93
    %v95 = vpop.xlane.xlu0 %94
    %v96 = vmax.f32 %v49, %v50
    %97 = vmax.xlane.f32.xlu0 %v96
    %v98 = vpop.xlane.xlu0 %97
    %v99 = vmul.f32 %v53, 0.00390625
    %v100 = vmul.f32 %v56, 0.00390625
    %v101 = vmul.f32 %v59, 0.00390625
    %v102 = vmul.f32 %v62, 0.00390625
    %v103 = vmul.f32 %v65, 0.00390625
    %v104 = vmul.f32 %v68, 0.00390625
    %v105 = vmul.f32 %v71, 0.00390625
    %v106 = vmul.f32 %v74, 0.00390625
    %vm107 = vcmask 7168
    %v108 = vsel %vm107, %v99, %v77
    %v109 = vsel %vm107, %v100, %v80
    %v110 = vsel %vm107, %v101, %v83
    %v111 = vsel %vm107, %v102, %v86
    %v112 = vsel %vm107, %v103, %v89
    %v113 = vsel %vm107, %v104, %v92
    %v114 = vsel %vm107, %v105, %v95
    %v115 = vsel %vm107, %v106, %v98
    %v116 = vld [vmem:[%s1] sm:$0x3]
    %v117 = vld [vmem:[%s3] sm:$0xff]
    %v118 = vld [vmem:[%s3 + $0x8] sm:$0xff]
    %v119 = vld [vmem:[%s3 + $0x10] sm:$0xff]
    %v120 = vld [vmem:[%s3 + $0x18] sm:$0xff]
    %v121 = vld [vmem:[%s2] sm:$0x3]
    %123 = vset.pattern.permute.xlu0 0
    %124 = vperm.xlu0 %123, %v121
    %v125 = vpop.permute.xlu0 %124
    %vm127 = vcmask 261120
    %v129 = vsel %vm127, %v116, 0
    %131 = vmatprep.subr.mxu0 0.0
    %132 = vmatpush1.msra.mxu0 %v108
    %133 = vmatprep.subr.mxu0 0.0
    %134 = vmatpush1.msra.mxu0 %v109
    %135 = vmatprep.subr.mxu0 0.0
    %136 = vmatpush1.msra.mxu0 %v110
    %137 = vmatprep.subr.mxu0 0.0
    %138 = vmatpush1.msra.mxu0 %v111
    %139 = vmatprep.subr.mxu0 0.0
    %140 = vmatpush1.msra.mxu0 0.0
    %141 = vmatprep.subr.mxu0 0.0
    %142 = vmatpush1.msra.mxu0 0.0
    %143 = vmatprep.subr.mxu0 0.0
    %144 = vmatpush1.msra.mxu0 0.0
    %145 = vmatprep.subr.mxu0 0.0
    %146 = vmatpush1.msra.mxu0 0.0
    %147 = vmatprep.subr.mxu0 0.0
    %148 = vmatpush1.msra.mxu0 0.0
    %149 = vmatprep.subr.mxu0 0.0
    %150 = vmatpush1.msra.mxu0 0.0
    %151 = vmatprep.subr.mxu0 0.0
    %152 = vmatpush1.msra.mxu0 0.0
    %153 = vmatprep.subr.mxu0 0.0
    %154 = vmatpush1.msra.mxu0 0.0
    %155 = vmatprep.subr.mxu0 0.0
    %156 = vmatpush1.msra.mxu0 0.0
    %157 = vmatprep.subr.mxu0 0.0
    %158 = vmatpush1.msra.mxu0 0.0
    %159 = vmatprep.subr.mxu0 0.0
    %160 = vmatpush1.msra.mxu0 0.0
    %161 = vmatprep.subr.mxu0 0.0
    %162 = vmatpush1.msra.mxu0 0.0
    %163 = vmatprep.subr.mxu0 0.0
    %164 = vmatpush1.msra.mxu0 0.0
    %165 = vmatprep.subr.mxu0 0.0
    %166 = vmatpush1.msra.mxu0 0.0
    %167 = vmatprep.subr.mxu0 0.0
    %168 = vmatpush1.msra.mxu0 0.0
    %169 = vmatprep.subr.mxu0 0.0
    %170 = vmatpush1.msra.mxu0 0.0
    %171 = vmatprep.subr.mxu0 0.0
    %172 = vmatpush1.msra.mxu0 0.0
    %173 = vmatprep.subr.mxu0 0.0
    %174 = vmatpush1.msra.mxu0 0.0
    %175 = vmatprep.subr.mxu0 0.0
    %176 = vmatpush1.msra.mxu0 0.0
    %177 = vmatprep.subr.mxu0 0.0
    %178 = vmatpush1.msra.mxu0 0.0
    %179 = vmatprep.subr.mxu0 0.0
    %180 = vmatpush1.msra.mxu0 0.0
    %181 = vmatprep.subr.mxu0 0.0
    %182 = vmatpush1.msra.mxu0 0.0
    %183 = vmatprep.subr.mxu0 0.0
    %184 = vmatpush1.msra.mxu0 0.0
    %185 = vmatprep.subr.mxu0 0.0
    %186 = vmatpush1.msra.mxu0 0.0
    %187 = vmatprep.subr.mxu0 0.0
    %188 = vmatpush1.msra.mxu0 0.0
    %189 = vmatprep.subr.mxu0 0.0
    %190 = vmatpush1.msra.mxu0 0.0
    %191 = vmatprep.subr.mxu0 0.0
    %192 = vmatpush1.msra.mxu0 0.0
    %193 = vmatprep.subr.mxu0 0.0
    %194 = vmatpush1.msra.mxu0 0.0
    %195 = vmatprep.mubr.f32.mxu0 0.0
    %196 = vmatmul.mubr.f32.gmra.mrb[0].mxu0 %v129
    %v197 = vpop.f32.mrb[0].mxu0
    %v198 = vadd.f32 %v125, %v197
    %v199 = vpop.f32.mrb[0].mxu0
    %200 = vdwg.mxu0
    %201 = vmatprep.subr.mxu0 0.0
    %202 = vmatpush1.msra.mxu0 %v112
    %203 = vmatprep.subr.mxu0 0.0
    %204 = vmatpush1.msra.mxu0 %v113
    %205 = vmatprep.subr.mxu0 0.0
    %206 = vmatpush1.msra.mxu0 %v114
    %207 = vmatprep.subr.mxu0 0.0
    %208 = vmatpush1.msra.mxu0 %v115
    %209 = vmatprep.subr.mxu0 0.0
    %210 = vmatpush1.msra.mxu0 0.0
    %211 = vmatprep.subr.mxu0 0.0
    %212 = vmatpush1.msra.mxu0 0.0
    %213 = vmatprep.subr.mxu0 0.0
    %214 = vmatpush1.msra.mxu0 0.0
    %215 = vmatprep.subr.mxu0 0.0
    %216 = vmatpush1.msra.mxu0 0.0
    %217 = vmatprep.subr.mxu0 0.0
    %218 = vmatpush1.msra.mxu0 0.0
    %219 = vmatprep.subr.mxu0 0.0
    %220 = vmatpush1.msra.mxu0 0.0
    %221 = vmatprep.subr.mxu0 0.0
    %222 = vmatpush1.msra.mxu0 0.0
    %223 = vmatprep.subr.mxu0 0.0
    %224 = vmatpush1.msra.mxu0 0.0
    %225 = vmatprep.subr.mxu0 0.0
    %226 = vmatpush1.msra.mxu0 0.0
    %227 = vmatprep.subr.mxu0 0.0
    %228 = vmatpush1.msra.mxu0 0.0
    %229 = vmatprep.subr.mxu0 0.0
    %230 = vmatpush1.msra.mxu0 0.0
    %231 = vmatprep.subr.mxu0 0.0
    %232 = vmatpush1.msra.mxu0 0.0
    %233 = vmatprep.subr.mxu0 0.0
    %234 = vmatpush1.msra.mxu0 0.0
    %235 = vmatprep.subr.mxu0 0.0
    %236 = vmatpush1.msra.mxu0 0.0
    %237 = vmatprep.subr.mxu0 0.0
    %238 = vmatpush1.msra.mxu0 0.0
    %239 = vmatprep.subr.mxu0 0.0
    %240 = vmatpush1.msra.mxu0 0.0
    %241 = vmatprep.subr.mxu0 0.0
    %242 = vmatpush1.msra.mxu0 0.0
    %243 = vmatprep.subr.mxu0 0.0
    %244 = vmatpush1.msra.mxu0 0.0
    %245 = vmatprep.subr.mxu0 0.0
    %246 = vmatpush1.msra.mxu0 0.0
    %247 = vmatprep.subr.mxu0 0.0
    %248 = vmatpush1.msra.mxu0 0.0
    %249 = vmatprep.subr.mxu0 0.0
    %250 = vmatpush1.msra.mxu0 0.0
    %251 = vmatprep.subr.mxu0 0.0
    %252 = vmatpush1.msra.mxu0 0.0
    %253 = vmatprep.subr.mxu0 0.0
    %254 = vmatpush1.msra.mxu0 0.0
    %255 = vmatprep.subr.mxu0 0.0
    %256 = vmatpush1.msra.mxu0 0.0
    %257 = vmatprep.subr.mxu0 0.0
    %258 = vmatpush1.msra.mxu0 0.0
    %259 = vmatprep.subr.mxu0 0.0
    %260 = vmatpush1.msra.mxu0 0.0
    %261 = vmatprep.subr.mxu0 0.0
    %262 = vmatpush1.msra.mxu0 0.0
    %263 = vmatprep.subr.mxu0 0.0
    %264 = vmatpush1.msra.mxu0 0.0
    %265 = vmatprep.mubr.f32.mxu0 0.0
    %266 = vmatmul.mubr.f32.gmra.mrb[0].mxu0 %v129
    %v267 = vpop.f32.mrb[0].mxu0
    %v268 = vadd.f32 %v125, %v267
    %v269 = vpop.f32.mrb[0].mxu0
    %270 = vdwg.mxu0
    %v271 = vmax.f32 %v198, 0.0
    %v272 = vmax.f32 %v268, 0.0
    %v273 = vld [vmem:[%s4] sm:$0xff]
    %v274 = vld [vmem:[%s4 + $0x8] sm:$0xff]
    %v275 = vld [vmem:[%s4 + $0x10] sm:$0xff]
    %v276 = vld [vmem:[%s4 + $0x18] sm:$0xff]
    %278 = vset.pattern.permute.xlu0 0
    %279 = vperm.xlu0 %278, %v273
    %v280 = vpop.permute.xlu0 %279
    %283 = vset.pattern.permute.xlu0 0
    %284 = vperm.xlu0 %283, %v274
    %v285 = vpop.permute.xlu0 %284
    %288 = vset.pattern.permute.xlu0 0
    %289 = vperm.xlu0 %288, %v275
    %v290 = vpop.permute.xlu0 %289
    %293 = vset.pattern.permute.xlu0 0
    %294 = vperm.xlu0 %293, %v276
    %v295 = vpop.permute.xlu0 %294
    %vm297 = vcmask 15360
    %v299 = vsel %vm297, %v117, 0
    %v302 = vsel %vm297, %v118, 0
    %v305 = vsel %vm297, %v119, 0
    %v308 = vsel %vm297, %v120, 0
    %vm310 = vcmask 1041408
    %v312 = vsel %vm310, %v271, 0
    %314 = vmatprep.subr.mxu0 0.0
    %315 = vmatpush1.msra.mxu0 %v312
    %316 = vmatprep.subr.mxu0 0.0
    %317 = vmatpush1.msra.mxu0 0.0
    %318 = vmatprep.subr.mxu0 0.0
    %319 = vmatpush1.msra.mxu0 0.0
    %320 = vmatprep.subr.mxu0 0.0
    %321 = vmatpush1.msra.mxu0 0.0
    %322 = vmatprep.subr.mxu0 0.0
    %323 = vmatpush1.msra.mxu0 0.0
    %324 = vmatprep.subr.mxu0 0.0
    %325 = vmatpush1.msra.mxu0 0.0
    %326 = vmatprep.subr.mxu0 0.0
    %327 = vmatpush1.msra.mxu0 0.0
    %328 = vmatprep.subr.mxu0 0.0
    %329 = vmatpush1.msra.mxu0 0.0
    %330 = vmatprep.subr.mxu0 0.0
    %331 = vmatpush1.msra.mxu0 0.0
    %332 = vmatprep.subr.mxu0 0.0
    %333 = vmatpush1.msra.mxu0 0.0
    %334 = vmatprep.subr.mxu0 0.0
    %335 = vmatpush1.msra.mxu0 0.0
    %336 = vmatprep.subr.mxu0 0.0
    %337 = vmatpush1.msra.mxu0 0.0
    %338 = vmatprep.subr.mxu0 0.0
    %339 = vmatpush1.msra.mxu0 0.0
    %340 = vmatprep.subr.mxu0 0.0
    %341 = vmatpush1.msra.mxu0 0.0
    %342 = vmatprep.subr.mxu0 0.0
    %343 = vmatpush1.msra.mxu0 0.0
    %344 = vmatprep.subr.mxu0 0.0
    %345 = vmatpush1.msra.mxu0 0.0
    %346 = vmatprep.subr.mxu0 0.0
    %347 = vmatpush1.msra.mxu0 0.0
    %348 = vmatprep.subr.mxu0 0.0
    %349 = vmatpush1.msra.mxu0 0.0
    %350 = vmatprep.subr.mxu0 0.0
    %351 = vmatpush1.msra.mxu0 0.0
    %352 = vmatprep.subr.mxu0 0.0
    %353 = vmatpush1.msra.mxu0 0.0
    %354 = vmatprep.subr.mxu0 0.0
    %355 = vmatpush1.msra.mxu0 0.0
    %356 = vmatprep.subr.mxu0 0.0
    %357 = vmatpush1.msra.mxu0 0.0
    %358 = vmatprep.subr.mxu0 0.0
    %359 = vmatpush1.msra.mxu0 0.0
    %360 = vmatprep.subr.mxu0 0.0
    %361 = vmatpush1.msra.mxu0 0.0
    %362 = vmatprep.subr.mxu0 0.0
    %363 = vmatpush1.msra.mxu0 0.0
    %364 = vmatprep.subr.mxu0 0.0
    %365 = vmatpush1.msra.mxu0 0.0
    %366 = vmatprep.subr.mxu0 0.0
    %367 = vmatpush1.msra.mxu0 0.0
    %368 = vmatprep.subr.mxu0 0.0
    %369 = vmatpush1.msra.mxu0 0.0
    %370 = vmatprep.subr.mxu0 0.0
    %371 = vmatpush1.msra.mxu0 0.0
    %372 = vmatprep.subr.mxu0 0.0
    %373 = vmatpush1.msra.mxu0 0.0
    %374 = vmatprep.subr.mxu0 0.0
    %375 = vmatpush1.msra.mxu0 0.0
    %376 = vmatprep.subr.mxu0 0.0
    %377 = vmatpush1.msra.mxu0 0.0
    %378 = vmatprep.mubr.f32.mxu0 0.0
    %379 = vmatmul.mubr.f32.gmra.mrb[0].mxu0 %v299
    %v380 = vpop.f32.mrb[0].mxu0
    %v381 = vadd.f32 %v280, %v380
    %v382 = vpop.f32.mrb[0].mxu0
    %383 = vmatprep.mubr.f32.mxu0 0.0
    %384 = vmatmul.mubr.f32.gmra.mrb[0].mxu0 %v302
    %v385 = vpop.f32.mrb[0].mxu0
    %v386 = vadd.f32 %v285, %v385
    %v387 = vpop.f32.mrb[0].mxu0
    %388 = vmatprep.mubr.f32.mxu0 0.0
    %389 = vmatmul.mubr.f32.gmra.mrb[0].mxu0 %v305
    %v390 = vpop.f32.mrb[0].mxu0
    %v391 = vadd.f32 %v290, %v390
    %v392 = vpop.f32.mrb[0].mxu0
    %393 = vmatprep.mubr.f32.mxu0 0.0
    %394 = vmatmul.mubr.f32.gmra.mrb[0].mxu0 %v308
    %v395 = vpop.f32.mrb[0].mxu0
    %v396 = vadd.f32 %v295, %v395
    %v397 = vpop.f32.mrb[0].mxu0
    %398 = vdwg.mxu0
    %v400 = vsel %vm310, %v272, 0
    %402 = vmatprep.subr.mxu0 0.0
    %403 = vmatpush1.msra.mxu0 %v400
    %404 = vmatprep.subr.mxu0 0.0
    %405 = vmatpush1.msra.mxu0 0.0
    %406 = vmatprep.subr.mxu0 0.0
    %407 = vmatpush1.msra.mxu0 0.0
    %408 = vmatprep.subr.mxu0 0.0
    %409 = vmatpush1.msra.mxu0 0.0
    %410 = vmatprep.subr.mxu0 0.0
    %411 = vmatpush1.msra.mxu0 0.0
    %412 = vmatprep.subr.mxu0 0.0
    %413 = vmatpush1.msra.mxu0 0.0
    %414 = vmatprep.subr.mxu0 0.0
    %415 = vmatpush1.msra.mxu0 0.0
    %416 = vmatprep.subr.mxu0 0.0
    %417 = vmatpush1.msra.mxu0 0.0
    %418 = vmatprep.subr.mxu0 0.0
    %419 = vmatpush1.msra.mxu0 0.0
    %420 = vmatprep.subr.mxu0 0.0
    %421 = vmatpush1.msra.mxu0 0.0
    %422 = vmatprep.subr.mxu0 0.0
    %423 = vmatpush1.msra.mxu0 0.0
    %424 = vmatprep.subr.mxu0 0.0
    %425 = vmatpush1.msra.mxu0 0.0
    %426 = vmatprep.subr.mxu0 0.0
    %427 = vmatpush1.msra.mxu0 0.0
    %428 = vmatprep.subr.mxu0 0.0
    %429 = vmatpush1.msra.mxu0 0.0
    %430 = vmatprep.subr.mxu0 0.0
    %431 = vmatpush1.msra.mxu0 0.0
    %432 = vmatprep.subr.mxu0 0.0
    %433 = vmatpush1.msra.mxu0 0.0
    %434 = vmatprep.subr.mxu0 0.0
    %435 = vmatpush1.msra.mxu0 0.0
    %436 = vmatprep.subr.mxu0 0.0
    %437 = vmatpush1.msra.mxu0 0.0
    %438 = vmatprep.subr.mxu0 0.0
    %439 = vmatpush1.msra.mxu0 0.0
    %440 = vmatprep.subr.mxu0 0.0
    %441 = vmatpush1.msra.mxu0 0.0
    %442 = vmatprep.subr.mxu0 0.0
    %443 = vmatpush1.msra.mxu0 0.0
    %444 = vmatprep.subr.mxu0 0.0
    %445 = vmatpush1.msra.mxu0 0.0
    %446 = vmatprep.subr.mxu0 0.0
    %447 = vmatpush1.msra.mxu0 0.0
    %448 = vmatprep.subr.mxu0 0.0
    %449 = vmatpush1.msra.mxu0 0.0
    %450 = vmatprep.subr.mxu0 0.0
    %451 = vmatpush1.msra.mxu0 0.0
    %452 = vmatprep.subr.mxu0 0.0
    %453 = vmatpush1.msra.mxu0 0.0
    %454 = vmatprep.subr.mxu0 0.0
    %455 = vmatpush1.msra.mxu0 0.0
    %456 = vmatprep.subr.mxu0 0.0
    %457 = vmatpush1.msra.mxu0 0.0
    %458 = vmatprep.subr.mxu0 0.0
    %459 = vmatpush1.msra.mxu0 0.0
    %460 = vmatprep.subr.mxu0 0.0
    %461 = vmatpush1.msra.mxu0 0.0
    %462 = vmatprep.subr.mxu0 0.0
    %463 = vmatpush1.msra.mxu0 0.0
    %464 = vmatprep.subr.mxu0 0.0
    %465 = vmatpush1.msra.mxu0 0.0
    %466 = vmatprep.mubr.f32.mxu0 0.0
    %467 = vmatmul.mubr.f32.gmra.mrb[0].mxu0 %v299
    %v468 = vpop.f32.mrb[0].mxu0
    %v469 = vadd.f32 %v280, %v468
    %v470 = vpop.f32.mrb[0].mxu0
    %471 = vmatprep.mubr.f32.mxu0 0.0
    %472 = vmatmul.mubr.f32.gmra.mrb[0].mxu0 %v302
    %v473 = vpop.f32.mrb[0].mxu0
    %v474 = vadd.f32 %v285, %v473
    %v475 = vpop.f32.mrb[0].mxu0
    %476 = vmatprep.mubr.f32.mxu0 0.0
    %477 = vmatmul.mubr.f32.gmra.mrb[0].mxu0 %v305
    %v478 = vpop.f32.mrb[0].mxu0
    %v479 = vadd.f32 %v290, %v478
    %v480 = vpop.f32.mrb[0].mxu0
    %481 = vmatprep.mubr.f32.mxu0 0.0
    %482 = vmatmul.mubr.f32.gmra.mrb[0].mxu0 %v308
    %v483 = vpop.f32.mrb[0].mxu0
    %v484 = vadd.f32 %v295, %v483
    %v485 = vpop.f32.mrb[0].mxu0
    %486 = vdwg.mxu0
    %495 = vrot.lane.b32.xlu0 %v381, 127
    %v496 = vpop.permute.xlu0 %495
    %497 = vrot.lane.b32.xlu0 %v386, 127
    %v498 = vpop.permute.xlu0 %497
    %499 = vrot.lane.b32.xlu0 %v391, 127
    %v500 = vpop.permute.xlu0 %499
    %501 = vrot.lane.b32.xlu0 %v396, 127
    %v502 = vpop.permute.xlu0 %501
    %503 = vrot.lane.b32.xlu0 %v469, 127
    %v504 = vpop.permute.xlu0 %503
    %505 = vrot.lane.b32.xlu0 %v474, 127
    %v506 = vpop.permute.xlu0 %505
    %507 = vrot.lane.b32.xlu0 %v479, 127
    %v508 = vpop.permute.xlu0 %507
    %509 = vrot.lane.b32.xlu0 %v484, 127
    %v510 = vpop.permute.xlu0 %509
    %v519 = vadd.f32 %v381, %v496
    %v520 = vadd.f32 %v386, %v498
    %v521 = vadd.f32 %v391, %v500
    %v522 = vadd.f32 %v396, %v502
    %v523 = vadd.f32 %v469, %v504
    %v524 = vadd.f32 %v474, %v506
    %v525 = vadd.f32 %v479, %v508
    %v526 = vadd.f32 %v484, %v510
    %v527 = vxor.u32 %v519, 2147483648
    %v528 = vxor.u32 %v520, 2147483648
    %v529 = vxor.u32 %v521, 2147483648
    %v530 = vxor.u32 %v522, 2147483648
    %v531 = vxor.u32 %v523, 2147483648
    %v532 = vxor.u32 %v524, 2147483648
    %v533 = vxor.u32 %v525, 2147483648
    %v534 = vxor.u32 %v526, 2147483648
    %v535 = vmul.f32 %v527, 1.442695
    %v536 = vpow.pop %v535
    %v537 = vmul.f32 %v528, 1.442695
    %v538 = vpow.pop %v537
    %v539 = vmul.f32 %v529, 1.442695
    %v540 = vpow.pop %v539
    %v541 = vmul.f32 %v530, 1.442695
    %v542 = vpow.pop %v541
    %v543 = vmul.f32 %v531, 1.442695
    %v544 = vpow.pop %v543
    %v545 = vmul.f32 %v532, 1.442695
    %v546 = vpow.pop %v545
    %v547 = vmul.f32 %v533, 1.442695
    %v548 = vpow.pop %v547
    %v549 = vmul.f32 %v534, 1.442695
    %v550 = vpow.pop %v549
    %v551 = vadd.f32 %v536, 1.0
    %v552 = vadd.f32 %v538, 1.0
    %v553 = vadd.f32 %v540, 1.0
    %v554 = vadd.f32 %v542, 1.0
    %v555 = vadd.f32 %v544, 1.0
    %v556 = vadd.f32 %v546, 1.0
    %v557 = vadd.f32 %v548, 1.0
    %v558 = vadd.f32 %v550, 1.0
    %v559 = vrcp.pop %v551
    %v560 = vmul.f32 1.0, %v559
    %v561 = vrcp.pop %v552
    %v562 = vmul.f32 1.0, %v561
    %v563 = vrcp.pop %v553
    %v564 = vmul.f32 1.0, %v563
    %v565 = vrcp.pop %v554
    %v566 = vmul.f32 1.0, %v565
    %v567 = vrcp.pop %v555
    %v568 = vmul.f32 1.0, %v567
    %v569 = vrcp.pop %v556
    %v570 = vmul.f32 1.0, %v569
    %v571 = vrcp.pop %v557
    %v572 = vmul.f32 1.0, %v571
    %v573 = vrcp.pop %v558
    %v574 = vmul.f32 1.0, %v573
    %576 = vset.pattern.permute.xlu0 0
    %577 = vperm.xlu0 %576, %v560
    %v578 = vpop.permute.xlu0 %577
    %581 = vset.pattern.permute.xlu0 0
    %582 = vperm.xlu0 %581, %v562
    %v583 = vpop.permute.xlu0 %582
    %586 = vset.pattern.permute.xlu0 0
    %587 = vperm.xlu0 %586, %v564
    %v588 = vpop.permute.xlu0 %587
    %591 = vset.pattern.permute.xlu0 0
    %592 = vperm.xlu0 %591, %v566
    %v593 = vpop.permute.xlu0 %592
    %596 = vset.pattern.permute.xlu0 0
    %597 = vperm.xlu0 %596, %v568
    %v598 = vpop.permute.xlu0 %597
    %601 = vset.pattern.permute.xlu0 0
    %602 = vperm.xlu0 %601, %v570
    %v603 = vpop.permute.xlu0 %602
    %606 = vset.pattern.permute.xlu0 0
    %607 = vperm.xlu0 %606, %v572
    %v608 = vpop.permute.xlu0 %607
    %611 = vset.pattern.permute.xlu0 0
    %612 = vperm.xlu0 %611, %v574
    %v613 = vpop.permute.xlu0 %612
    %v615 = vmul.f32 %v35, %v578
    %v616 = vmul.f32 %v36, %v578
    %v617 = vmul.f32 %v37, %v583
    %v618 = vmul.f32 %v38, %v583
    %v619 = vmul.f32 %v39, %v588
    %v620 = vmul.f32 %v40, %v588
    %v621 = vmul.f32 %v41, %v593
    %v622 = vmul.f32 %v42, %v593
    %v623 = vmul.f32 %v43, %v598
    %v624 = vmul.f32 %v44, %v598
    %v625 = vmul.f32 %v45, %v603
    %v626 = vmul.f32 %v46, %v603
    %v627 = vmul.f32 %v47, %v608
    %v628 = vmul.f32 %v48, %v608
    %v629 = vmul.f32 %v49, %v613
    %v630 = vmul.f32 %v50, %v613
    %631 = vst [vmem:[#allocation5] sm:$0xff] %v615
    %632 = vst [vmem:[#allocation5 + $0x8] sm:$0xff] %v616
    %633 = vst [vmem:[#allocation5 + $0x10] sm:$0xff] %v617
    %634 = vst [vmem:[#allocation5 + $0x18] sm:$0xff] %v618
    %635 = vst [vmem:[#allocation5 + $0x20] sm:$0xff] %v619
    %636 = vst [vmem:[#allocation5 + $0x28] sm:$0xff] %v620
    %637 = vst [vmem:[#allocation5 + $0x30] sm:$0xff] %v621
    %638 = vst [vmem:[#allocation5 + $0x38] sm:$0xff] %v622
    %639 = vst [vmem:[#allocation5 + $0x40] sm:$0xff] %v623
    %640 = vst [vmem:[#allocation5 + $0x48] sm:$0xff] %v624
    %641 = vst [vmem:[#allocation5 + $0x50] sm:$0xff] %v625
    %642 = vst [vmem:[#allocation5 + $0x58] sm:$0xff] %v626
    %643 = vst [vmem:[#allocation5 + $0x60] sm:$0xff] %v627
    %644 = vst [vmem:[#allocation5 + $0x68] sm:$0xff] %v628
    %645 = vst [vmem:[#allocation5 + $0x70] sm:$0xff] %v629
    %646 = vst [vmem:[#allocation5 + $0x78] sm:$0xff] %v630
    // Predicated region
    $region26: #{tpu_custom_call.1} parent=1 // pred_check
      _
    $region27: #{tpu_custom_call.1} parent=1 // pred_check_branch
      %648 = sbr.rel (0) target = $region29
    $region28: #{tpu_custom_call.1} parent=1 // pred_region
      %s650 = ssub.s32 2048, 2048
      %651 = vsyncadd [#allocation4], %s650
      %s652 = sshll.u32 [#allocation5], 4
      %s653 = int_to_ptr.vmem [resolvable:$true] %s652
      %658 = dma.vmem_to_hbm [thread:$0]  %s653, 2048, %s5, [#allocation4], 256, 256, 16
    $region29: #{tpu_custom_call.1} parent=1 // pred_fallthru
      _
    // Predicated region
    $region30: #{tpu_custom_call.1} parent=1 // pred_check
      _
    $region31: #{tpu_custom_call.1} parent=1 // pred_check_branch
      %660 = sbr.rel (0) target = $region33
    $region32: #{tpu_custom_call.1} parent=1 // pred_region
      %661 = dma.done [#allocation4], 2048
    $region33: #{tpu_custom_call.1} parent=1 // pred_fallthru
      _
    %662 = vsyncpa [#allocation3], 1
    %663 = vsyncpa [#allocation4], 1

</llo_original>
